<compile_context>
chip_gen: v7x
topology: tpu7x:2x2x1
jax: 0.10.0
libtpu: 0.0.40
codegen_flags: <defaults>
</compile_context>

<pallas_src>
import jax
import jax.numpy as jnp
from jax import lax
from jax.experimental import pallas as pl
from jax.experimental.pallas import tpu as pltpu


def _mpgnn_kernel(idx_ref, e_ref, wcat_ref, bcat_ref, whm_ref, base_ref,
                  h_out_ref, e_out_ref, msg_agg_ref):
    step = pl.program_id(0)
    nsteps = pl.num_programs(0)

    hid = base_ref.shape[0]          # H
    n = base_ref.shape[1]            # N
    tile_e = e_ref.shape[1]          # TILE_E

    @pl.when(step == 0)
    def _init():
        msg_agg_ref[...] = jnp.zeros_like(msg_agg_ref)

    # Node-major one-hots: rows = node ids, cols = edges (lane axis).
    send_row = idx_ref[0:1, :]                                       # [1, TILE_E]
    rec_row = idx_ref[1:2, :]                                        # [1, TILE_E]
    iota_n = lax.broadcasted_iota(jnp.int32, (n, tile_e), 0)         # [N, TILE_E]
    send_oh = (iota_n == send_row).astype(jnp.float32)               # [N, TILE_E]
    rec_oh = (iota_n == rec_row).astype(jnp.float32)                 # [N, TILE_E]

    # Single fused MXU contraction of depth K = 2N + H:
    #   rows of wcat = [message_mlp | e_update] outputs (2H)
    #   cols of wcat / rows of op = [send one-hot | rec one-hot | edge features]
    op = jnp.concatenate([send_oh, rec_oh, e_ref[...]], axis=0)      # [2N+H, TILE_E]
    fused = (jnp.dot(wcat_ref[...], op, preferred_element_type=jnp.float32)
             + bcat_ref[...])                                        # [2H, TILE_E]

    messages = fused[:hid, :]                                        # [H, TILE_E]
    e_out_ref[...] = fused[hid:, :]                                  # e' (feature-major)

    # scatter_add over receivers, reusing rec_oh (contract the edge/lane axis):
    #   msg_agg_t[h, k] += sum_j messages[h, j] * rec_oh[k, j]
    msg_agg_ref[...] += lax.dot_general(
        messages, rec_oh, (((1,), (1,)), ((), ())),
        preferred_element_type=jnp.float32)                          # [H, N]

    @pl.when(step == nsteps - 1)
    def _finalize():
        # h'^T = (h @ Wh_h + bh)^T  +  Wh_m^T-free form: Wh[:,H:] @ msg_agg^T
        h_out_ref[...] = base_ref[...] + jnp.dot(
            whm_ref[...], msg_agg_ref[...], preferred_element_type=jnp.float32)


def _default_vmem_limit():
    try:
        cap = int(pltpu.get_tpu_info().vmem_capacity_bytes)
        return max(32 * 1024 * 1024, int(0.75 * cap))   # ~96 MiB v5e/v6e, ~48 MiB v7x
    except Exception:
        return 64 * 1024 * 1024


def _choose_tile_e(E, N, H, requested=None):
    if requested is None:
        # Per-tile f32 temporaries: one-hots (2N) + fused operand (2N+H) +
        # fused result (2H) + double-buffered e in/out (~4H) rows of TILE_E lanes.
        bytes_per_edge = 4 * (2 * N + (2 * N + H) + 2 * H + 4 * H)
        tile = (6 * 1024 * 1024) // max(bytes_per_edge, 1)
        tile = max(128, min(2048, tile))
    else:
        tile = int(requested)
    tile = max(128, (tile // 128) * 128)
    tile = min(tile, ((E + 127) // 128) * 128)        # don't exceed padded edge count
    return max(tile, 128)


def mpgnn_layer(h, e, edge_index, params, *, tile_e=None):
    """Pallas implementation of MPGNNLayer.forward: (h, e, edge_index) -> (h', e')."""
    N, H = h.shape
    E = e.shape[0]
    hp = lax.Precision.HIGHEST

    tile = _choose_tile_e(E, N, H, tile_e)
    num_tiles = int(pl.cdiv(E, tile))
    e_pad = num_tiles * tile
    pad = e_pad - E

    # --- edge streams (feature-major / lane-dense) ------------------------------
    send = edge_index[0].astype(jnp.int32)
    rec = edge_index[1].astype(jnp.int32)
    idx = jnp.stack([send, rec], axis=0)                         # [2, E]
    e_t = e.astype(jnp.float32).T                                # [H, E]
    if pad:
        idx = jnp.concatenate([idx, jnp.full((2, pad), N, jnp.int32)], axis=1)
        e_t = jnp.concatenate([e_t, jnp.zeros((H, pad), jnp.float32)], axis=1)

    # --- hoisted node projections + fused weight slab (plain XLA, once) ---------
    # PyTorch Linear: y = x @ W.T + b with W [out, in].  All kernel operands are
    # feature-major, so project h once and lay the weights out as
    #   Wcat [2H, 2N+H] = [[Wm[:, :H]@h^T | Wm[:, H:2H]@h^T | Wm[:, 2H:]],
    #                      [We[:, :H]@h^T | We[:, H:2H]@h^T | We[:, 2H:]]]
    ht = h.astype(jnp.float32).T                                 # [H, N]
    wm = params["message_w"].astype(jnp.float32)                 # [H, 3H]
    we = params["e_w"].astype(jnp.float32)                       # [H, 3H]
    wh = params["h_w"].astype(jnp.float32)                       # [H, 2H]
    proj_msg = jnp.concatenate(
        [jnp.dot(wm[:, :H], ht, precision=hp),
         jnp.dot(wm[:, H:2 * H], ht, precision=hp),
         wm[:, 2 * H:]], axis=1)                                 # [H, 2N+H]
    proj_e = jnp.concatenate(
        [jnp.dot(we[:, :H], ht, precision=hp),
         jnp.dot(we[:, H:2 * H], ht, precision=hp),
         we[:, 2 * H:]], axis=1)                                 # [H, 2N+H]
    wcat = jnp.concatenate([proj_msg, proj_e], axis=0)           # [2H, 2N+H]
    bcat = jnp.concatenate([params["message_b"], params["e_b"]]
                           ).astype(jnp.float32).reshape(2 * H, 1)
    base_t = (jnp.dot(wh[:, :H], ht, precision=hp)
              + params["h_b"].astype(jnp.float32).reshape(H, 1))  # [H, N]
    whm = wh[:, H:]                                               # [H, H]

    inputs = (idx, e_t, wcat, bcat, whm, base_t)

    resident = lambda shape: pl.BlockSpec(shape, lambda i: (0, 0))
    in_specs = [
        pl.BlockSpec((2, tile), lambda i: (0, i)),       # packed send/rec indices
        pl.BlockSpec((H, tile), lambda i: (0, i)),       # e (feature-major)
        resident((2 * H, 2 * N + H)),                    # fused weight slab
        resident((2 * H, 1)),                            # fused bias (column)
        resident((H, H)),                                # Wh_m (transposed use)
        resident((H, N)),                                # (h @ Wh_h + bh)^T
    ]
    out_specs = (
        pl.BlockSpec((H, N), lambda i: (0, 0)),          # h'^T   (accumulator-style)
        pl.BlockSpec((H, tile), lambda i: (0, i)),       # e'^T   (lane-dense blocks)
    )
    scratch_shapes = [pltpu.VMEM((H, N), jnp.float32)]   # msg_agg^T accumulator

    flops = int(2 * (2 * H) * (2 * N + H) * e_pad        # fused gather matmul
                + 2 * H * N * e_pad                      # scatter matmul
                + 2 * H * H * N)                         # finalize
    bytes_accessed = int(4 * (2 * H * e_pad              # e in + e' out
                              + 2 * e_pad                # indices
                              + 2 * H * (2 * N + H)      # weight slab
                              + 2 * H                    # bias
                              + H * H + 2 * H * N))      # Wh_m, base, h'

    h_out_t, e_out_t = pl.pallas_call(
        _mpgnn_kernel,
        out_shape=(jax.ShapeDtypeStruct((H, N), jnp.float32),
                   jax.ShapeDtypeStruct((H, e_pad), jnp.float32)),
        grid_spec=pltpu.PrefetchScalarGridSpec(
            num_scalar_prefetch=0,
            grid=(num_tiles,),
            in_specs=in_specs,
            out_specs=out_specs,
            scratch_shapes=scratch_shapes),
        compiler_params=pltpu.CompilerParams(
            dimension_semantics=("arbitrary",),          # edge axis carries the reduction
            vmem_limit_bytes=_default_vmem_limit()),
        cost_estimate=pl.CostEstimate(flops=flops, transcendentals=0,
                                      bytes_accessed=bytes_accessed),
    )(*inputs)

    return h_out_t.T, e_out_t[:, :E].T


def mpgnn_reference(h, e, edge_index, params):
    """Pure-JAX reference mirroring the PyTorch module (full f32 precision)."""
    hp = lax.Precision.HIGHEST
    send, rec = edge_index
    h_send, h_rec = h[send], h[rec]
    msg_in = jnp.concatenate([h_send, h_rec, e], axis=1)
    messages = jnp.dot(msg_in, params["message_w"].T, precision=hp) + params["message_b"]
    messages_agg = jnp.zeros((h.shape[0], h.shape[1]), messages.dtype).at[rec].add(messages)
    h_new = (jnp.dot(jnp.concatenate([h, messages_agg], axis=1),
                     params["h_w"].T, precision=hp) + params["h_b"])
    e_new = jnp.dot(msg_in, params["e_w"].T, precision=hp) + params["e_b"]
    return h_new, e_new


def _init_linear(key, out_dim, in_dim):
    kw, kb = jax.random.split(key)
    bound = 1.0 / jnp.sqrt(in_dim)
    w = jax.random.uniform(kw, (out_dim, in_dim), jnp.float32, -bound, bound)
    b = jax.random.uniform(kb, (out_dim,), jnp.float32, -bound, bound)
    return w, b


if __name__ == "__main__":
    H = 32    # num_hidden
    N = 16    # nodes
    E = 320   # edges (not a multiple of the tile -> exercises padding + multi-tile accum)

    key = jax.random.PRNGKey(0)
    k_h, k_e, k_s, k_r, k_m, k_hu, k_eu = jax.random.split(key, 7)

    h = jax.random.normal(k_h, (N, H), jnp.float32)
    e = jax.random.normal(k_e, (E, H), jnp.float32)
    send = jax.random.randint(k_s, (E,), 0, N, jnp.int32)
    rec = jax.random.randint(k_r, (E,), 0, N, jnp.int32)
    edge_index = jnp.stack([send, rec], axis=0)   # [2, E]

    wm, bm = _init_linear(k_m, H, 3 * H)
    wh, bh = _init_linear(k_hu, H, 2 * H)
    we, be = _init_linear(k_eu, H, 3 * H)
    params = {"message_w": wm, "message_b": bm,
              "h_w": wh, "h_b": bh,
              "e_w": we, "e_b": be}

    h_out, e_out = mpgnn_layer(h, e, edge_index, params, tile_e=128)  # 3 edge tiles
    jax.block_until_ready((h_out, e_out))

    h_ref, e_ref = mpgnn_reference(h, e, edge_index, params)
    assert h_out.shape == (N, H) and e_out.shape == (E, H)
    # Tolerance covers f32 MXU pass-decomposition / summation-order differences.
    assert jnp.allclose(h_out, h_ref, atol=1e-3, rtol=1e-3)
    assert jnp.allclose(e_out, e_ref, atol=1e-3, rtol=1e-3)

    print("KERNEL_OK")
</pallas_src>

<mosaic_0001>
module attributes {stable_mosaic.version = 11 : i64} {
  func.func @_mpgnn_kernel(%arg0: i32, %arg1: memref<2x128xi32, #tpu.memory_space<vmem>>, %arg2: memref<32x128xf32, #tpu.memory_space<vmem>>, %arg3: memref<64x64xf32, #tpu.memory_space<vmem>>, %arg4: memref<64x1xf32, #tpu.memory_space<vmem>>, %arg5: memref<32x32xf32, #tpu.memory_space<vmem>>, %arg6: memref<32x16xf32, #tpu.memory_space<vmem>>, %arg7: memref<32x16xf32, #tpu.memory_space<vmem>>, %arg8: memref<32x128xf32, #tpu.memory_space<vmem>>, %arg9: memref<32x16xf32, #tpu.memory_space<vmem>>) attributes {dimension_semantics = [#tpu.dimension_semantics<arbitrary>], iteration_bounds = array<i64: 3>, scalar_prefetch = 0 : i64, scratch_operands = 1 : i64, tpu.core_type = #tpu.core_type<tc>, window_params = [{transform_indices = @transform_0, window_bounds = array<i64: 2, 128>}, {transform_indices = @transform_1, window_bounds = array<i64: 32, 128>}, {pipeline_mode = #tpu.pipeline_mode<synchronous>, transform_indices = @transform_2, window_bounds = array<i64: 64, 64>}, {pipeline_mode = #tpu.pipeline_mode<synchronous>, transform_indices = @transform_3, window_bounds = array<i64: 64, 1>}, {pipeline_mode = #tpu.pipeline_mode<synchronous>, transform_indices = @transform_4, window_bounds = array<i64: 32, 32>}, {pipeline_mode = #tpu.pipeline_mode<synchronous>, transform_indices = @transform_5, window_bounds = array<i64: 32, 16>}, {pipeline_mode = #tpu.pipeline_mode<synchronous>, transform_indices = @transform_6, window_bounds = array<i64: 32, 16>}, {transform_indices = @transform_7, window_bounds = array<i64: 32, 128>}]} {
    %c0_i32 = arith.constant 0 : i32
    %0 = arith.cmpi eq, %arg0, %c0_i32 : i32
    %1 = arith.extui %0 : i1 to i32
    %c0_i32_0 = arith.constant 0 : i32
    %2 = arith.cmpi ne, %1, %c0_i32_0 : i32
    scf.if %2 {
      %cst_17 = arith.constant 0.000000e+00 : f32
      %31 = vector.broadcast %cst_17 : f32 to vector<32x16xf32>
      %c0_18 = arith.constant 0 : index
      %c0_19 = arith.constant 0 : index
      %32 = vector.load %arg9[%c0_18, %c0_19] : memref<32x16xf32, #tpu.memory_space<vmem>>, vector<32x16xf32>
      tpu.vector_store %arg9[%c0_18, %c0_19], %31 {strides = array<i32>} : memref<32x16xf32, #tpu.memory_space<vmem>>, vector<32x16xf32>,
    } else {
    }
    %c0 = arith.constant 0 : index
    %c0_1 = arith.constant 0 : index
    %3 = vector.load %arg1[%c0, %c0_1] : memref<2x128xi32, #tpu.memory_space<vmem>>, vector<1x128xi32>
    %c1 = arith.constant 1 : index
    %c0_2 = arith.constant 0 : index
    %4 = vector.load %arg1[%c1, %c0_2] : memref<2x128xi32, #tpu.memory_space<vmem>>, vector<1x128xi32>
    %5 = tpu.iota {dimensions = array<i32: 0>} : vector<16x128xi32>
    %6 = vector.broadcast %3 : vector<1x128xi32> to vector<16x128xi32>
    %7 = arith.cmpi eq, %5, %6 : vector<16x128xi32>
    %8 = arith.extui %7 : vector<16x128xi1> to vector<16x128xi32>
    %9 = arith.sitofp %8 : vector<16x128xi32> to vector<16x128xf32>
    %10 = vector.broadcast %4 : vector<1x128xi32> to vector<16x128xi32>
    %11 = arith.cmpi eq, %5, %10 : vector<16x128xi32>
    %12 = arith.extui %11 : vector<16x128xi1> to vector<16x128xi32>
    %13 = arith.sitofp %12 : vector<16x128xi32> to vector<16x128xf32>
    %c0_3 = arith.constant 0 : index
    %c0_4 = arith.constant 0 : index
    %14 = vector.load %arg2[%c0_3, %c0_4] : memref<32x128xf32, #tpu.memory_space<vmem>>, vector<32x128xf32>
    %15 = tpu.concatenate %9, %13, %14 in 0 : vector<16x128xf32>, vector<16x128xf32>, vector<32x128xf32> -> vector<64x128xf32>
    %c0_5 = arith.constant 0 : index
    %c0_6 = arith.constant 0 : index
    %16 = vector.load %arg3[%c0_5, %c0_6] : memref<64x64xf32, #tpu.memory_space<vmem>>, vector<64x64xf32>
    %cst = arith.constant dense<0.000000e+00> : vector<64x128xf32>
    %17 = tpu.matmul %16, %15, %cst {dimension_numbers = #tpu.dot_dimension_numbers<[1], [0], [0], [1], [0, 0, 1, 1], [], []>} : vector<64x64xf32>, vector<64x128xf32>, vector<64x128xf32> -> vector<64x128xf32>
    %c0_7 = arith.constant 0 : index
    %c0_8 = arith.constant 0 : index
    %18 = vector.load %arg4[%c0_7, %c0_8] : memref<64x1xf32, #tpu.memory_space<vmem>>, vector<64x1xf32>
    %19 = vector.broadcast %18 : vector<64x1xf32> to vector<64x128xf32>
    %20 = arith.addf %17, %19 : vector<64x128xf32>
    %21 = vector.extract_strided_slice %20 {offsets = [0, 0], sizes = [32, 128], strides = [1, 1]} : vector<64x128xf32> to vector<32x128xf32>
    %22 = vector.extract_strided_slice %20 {offsets = [32, 0], sizes = [32, 128], strides = [1, 1]} : vector<64x128xf32> to vector<32x128xf32>
    %c0_9 = arith.constant 0 : index
    %c0_10 = arith.constant 0 : index
    %23 = vector.load %arg8[%c0_9, %c0_10] : memref<32x128xf32, #tpu.memory_space<vmem>>, vector<32x128xf32>
    tpu.vector_store %arg8[%c0_9, %c0_10], %22 {strides = array<i32>} : memref<32x128xf32, #tpu.memory_space<vmem>>, vector<32x128xf32>,
    %c0_11 = arith.constant 0 : index
    %c0_12 = arith.constant 0 : index
    %24 = vector.load %arg9[%c0_11, %c0_12] : memref<32x16xf32, #tpu.memory_space<vmem>>, vector<32x16xf32>
    %cst_13 = arith.constant dense<0.000000e+00> : vector<32x16xf32>
    %25 = tpu.matmul %21, %13, %cst_13 {dimension_numbers = #tpu.dot_dimension_numbers<[1], [1], [0], [0], [0, 0, 1, 0], [], []>} : vector<32x128xf32>, vector<16x128xf32>, vector<32x16xf32> -> vector<32x16xf32>
    %26 = arith.addf %24, %25 : vector<32x16xf32>
    %c0_14 = arith.constant 0 : index
    %c0_15 = arith.constant 0 : index
    %27 = vector.load %arg9[%c0_14, %c0_15] : memref<32x16xf32, #tpu.memory_space<vmem>>, vector<32x16xf32>
    tpu.vector_store %arg9[%c0_14, %c0_15], %26 {strides = array<i32>} : memref<32x16xf32, #tpu.memory_space<vmem>>, vector<32x16xf32>,
    %c2_i32 = arith.constant 2 : i32
    %28 = arith.cmpi eq, %arg0, %c2_i32 : i32
    %29 = arith.extui %28 : i1 to i32
    %c0_i32_16 = arith.constant 0 : i32
    %30 = arith.cmpi ne, %29, %c0_i32_16 : i32
    scf.if %30 {
      %c0_17 = arith.constant 0 : index
      %c0_18 = arith.constant 0 : index
      %31 = vector.load %arg6[%c0_17, %c0_18] : memref<32x16xf32, #tpu.memory_space<vmem>>, vector<32x16xf32>
      %c0_19 = arith.constant 0 : index
      %c0_20 = arith.constant 0 : index
      %32 = vector.load %arg5[%c0_19, %c0_20] : memref<32x32xf32, #tpu.memory_space<vmem>>, vector<32x32xf32>
      %c0_21 = arith.constant 0 : index
      %c0_22 = arith.constant 0 : index
      %33 = vector.load %arg9[%c0_21, %c0_22] : memref<32x16xf32, #tpu.memory_space<vmem>>, vector<32x16xf32>
      %cst_23 = arith.constant dense<0.000000e+00> : vector<32x16xf32>
      %34 = tpu.matmul %32, %33, %cst_23 {dimension_numbers = #tpu.dot_dimension_numbers<[1], [0], [0], [1], [0, 0, 1, 1], [], []>} : vector<32x32xf32>, vector<32x16xf32>, vector<32x16xf32> -> vector<32x16xf32>
      %35 = arith.addf %31, %34 : vector<32x16xf32>
      %c0_24 = arith.constant 0 : index
      %c0_25 = arith.constant 0 : index
      %36 = vector.load %arg7[%c0_24, %c0_25] : memref<32x16xf32, #tpu.memory_space<vmem>>, vector<32x16xf32>
      tpu.vector_store %arg7[%c0_24, %c0_25], %35 {strides = array<i32>} : memref<32x16xf32, #tpu.memory_space<vmem>>, vector<32x16xf32>,
    } else {
    }
    return
  }
  func.func @transform_0(%arg0: i32) -> (i32, i32) {
    %c0_i32 = arith.constant 0 : i32
    %c0_i32_0 = arith.constant 0 : i32
    return %c0_i32, %arg0 : i32, i32
  }
  func.func @transform_1(%arg0: i32) -> (i32, i32) {
    %c0_i32 = arith.constant 0 : i32
    %c0_i32_0 = arith.constant 0 : i32
    return %c0_i32, %arg0 : i32, i32
  }
  func.func @transform_2(%arg0: i32) -> (i32, i32) {
    %c0_i32 = arith.constant 0 : i32
    %c0_i32_0 = arith.constant 0 : i32
    %c0_i32_1 = arith.constant 0 : i32
    return %c0_i32, %c0_i32_0 : i32, i32
  }
  func.func @transform_3(%arg0: i32) -> (i32, i32) {
    %c0_i32 = arith.constant 0 : i32
    %c0_i32_0 = arith.constant 0 : i32
    %c0_i32_1 = arith.constant 0 : i32
    return %c0_i32, %c0_i32_0 : i32, i32
  }
  func.func @transform_4(%arg0: i32) -> (i32, i32) {
    %c0_i32 = arith.constant 0 : i32
    %c0_i32_0 = arith.constant 0 : i32
    %c0_i32_1 = arith.constant 0 : i32
    return %c0_i32, %c0_i32_0 : i32, i32
  }
  func.func @transform_5(%arg0: i32) -> (i32, i32) {
    %c0_i32 = arith.constant 0 : i32
    %c0_i32_0 = arith.constant 0 : i32
    %c0_i32_1 = arith.constant 0 : i32
    return %c0_i32, %c0_i32_0 : i32, i32
  }
  func.func @transform_6(%arg0: i32) -> (i32, i32) {
    %c0_i32 = arith.constant 0 : i32
    %c0_i32_0 = arith.constant 0 : i32
    %c0_i32_1 = arith.constant 0 : i32
    return %c0_i32, %c0_i32_0 : i32, i32
  }
  func.func @transform_7(%arg0: i32) -> (i32, i32) {
    %c0_i32 = arith.constant 0 : i32
    %c0_i32_0 = arith.constant 0 : i32
    return %c0_i32, %arg0 : i32, i32
  }
}

</mosaic_0001>

<llo_original>
// kernel: tpu_custom_call.1
$region0: #{tpu_custom_call.1}
  #allocation0 [shape = 'u32[]', space=smem, size = 0x4, offset = 0x4, fixed_abs, tag = 'smem constant byte address 0x4 - core index']
  #allocation1 [shape = 'u32[144,128]{1,0:T(1,128)}', space=vmem, size = 0x12000, scoped, tag = 'internal scratch']
  #allocation2 [shape = 'f32[32,16]{1,0:T(8,128)}', space=vmem, size = 0x4000, scoped, tag = 'scratch operand']
  %s0 = inlined_call_operand.hbm [shape: s32[2,384], index: 0, kind: input, shape index: {}]
  %s1 = inlined_call_operand.hbm [shape: f32[32,384], index: 1, kind: input, shape index: {}]
  %s2 = inlined_call_operand.hbm [shape: f32[64,64], index: 2, kind: input, shape index: {}]
  %s3 = inlined_call_operand.hbm [shape: f32[64,1], index: 3, kind: input, shape index: {}]
  %s4 = inlined_call_operand.hbm [shape: f32[32,32], index: 4, kind: input, shape index: {}]
  %s5 = inlined_call_operand.hbm [shape: f32[32,16], index: 5, kind: input, shape index: {}]
  %s6 = inlined_call_operand.hbm [shape: f32[32,16], index: 6, kind: output, shape index: {0}]
  %s7 = inlined_call_operand.hbm [shape: f32[32,384], index: 7, kind: output, shape index: {1}]
  %8 = xla_tuple %s6, %s7
  %s9 = sld [smem:[#allocation0]]
  $region97: #{tpu_custom_call.1} parent=0
    _
  %s11 = ssub.s32 1, %s9
  %s12 = scalar_select 0, %s11, %s9
  $region1: #{tpu_custom_call.1} parent=0
    #allocation3 [shape = 'u8[2048]{0}', space=vmem, size = 0x800, scoped, tag = 'input window, operand 0']
    #allocation4 [shape = 's32[2]{0}', space=sflag, size = 0x8, scoped, tag = 'scoped memory for tpu_custom_call.1']
    #allocation5 [shape = 's32[2]{0}', space=sflag, size = 0x8, scoped, tag = 'scoped memory for tpu_custom_call.1']
    #allocation6 [shape = 'u8[32768]{0}', space=vmem, size = 0x8000, scoped, tag = 'input window, operand 1']
    #allocation7 [shape = 's32[2]{0}', space=sflag, size = 0x8, scoped, tag = 'scoped memory for tpu_custom_call.1']
    #allocation8 [shape = 'u8[32768]{0}', space=vmem, size = 0x8000, scoped, tag = 'input window, operand 2, single buffered']
    #allocation9 [shape = 'u8[32768]{0}', space=vmem, size = 0x8000, scoped, tag = 'input window, operand 3, single buffered']
    #allocation10 [shape = 's32[1]{0}', space=sflag, size = 0x4, scoped, tag = 'scoped memory for tpu_custom_call.1']
    #allocation11 [shape = 'u8[16384]{0}', space=vmem, size = 0x4000, scoped, tag = 'input window, operand 4, single buffered']
    #allocation12 [shape = 'u8[16384]{0}', space=vmem, size = 0x4000, scoped, tag = 'input window, operand 5, single buffered']
    #allocation13 [shape = 's32[1]{0}', space=sflag, size = 0x4, scoped, tag = 'scoped memory for tpu_custom_call.1']
    #allocation14 [shape = 'u8[16384]{0}', space=vmem, size = 0x4000, scoped, tag = 'output window, operand 0, single buffered']
    #allocation15 [shape = 'u8[32768]{0}', space=vmem, size = 0x8000, scoped, tag = 'output window, operand 1']
    #allocation16 [shape = 's32[2]{0}', space=sflag, size = 0x8, scoped, tag = 'scoped memory for tpu_custom_call.1']
    %13 = vsyncpa [#allocation4], 0
    %s14 = scalar_lea.sflag [#allocation4], 1
    %15 = vsyncpa %s14, 0
    %16 = vsyncpa [#allocation7], 0
    %s17 = scalar_lea.sflag [#allocation7], 1
    %18 = vsyncpa %s17, 0
    %19 = vsyncpa [#allocation10], 0
    %20 = vsyncpa [#allocation13], 0
    %21 = vsyncpa [#allocation5], 0
    %22 = vsyncpa [#allocation16], 0
    %s23 = scalar_lea.sflag [#allocation16], 1
    %24 = vsyncpa %s23, 0
    loop: start=0, step=1, limit=5
    $region2: #{tpu_custom_call.1} parent=1 // loop_pre_header
      _
    $region3: #{tpu_custom_call.1} parent=1 // loop_header
      %s26 = sphi 0, %s30
      %p27 = scmp.ge.s32.totalorder %s26, 5
      %s36 = sphi 0, %s38
      %s39 = sphi 0, %s36
      %s40 = sphi 0, %s39
      %s56 = sphi 0, %s40
      %s62 = sphi 0, %s64
      %s65 = sphi 0, %s62
      %s66 = sphi 0, %s65
      %s82 = sphi 0, %s66
      %s86 = sphi 0, %s86
      %s88 = sphi 0, %s86
      %s89 = sphi 0, %s88
      %s103 = sphi 0, %s89
      %s107 = sphi 0, %s107
      %s109 = sphi 0, %s107
      %s110 = sphi 0, %s109
      %s124 = sphi 0, %s110
      %s128 = sphi 0, %s128
      %s130 = sphi 0, %s128
      %s131 = sphi 0, %s130
      %s145 = sphi 0, %s131
      %s149 = sphi 0, %s149
      %s151 = sphi 0, %s149
      %s152 = sphi 0, %s151
      %s166 = sphi 0, %s152
      %s170 = sphi 0, %s170
      %s172 = sphi 0, %s170
      %s173 = sphi 0, %s172
      %s187 = sphi 0, %s173
      %s193 = sphi 0, %s195
      %s196 = sphi 0, %s193
      %s197 = sphi 0, %s196
      %s213 = sphi 0, %s197
    $region4: #{tpu_custom_call.1} parent=1 // loop_header_branch
      %29 = sbr.rel (%p27) target = $region8
    $region5: #{tpu_custom_call.1} parent=1 // loop_body
      %s31 = ssub.s32 %s26, 1
      %s32 = ssub.s32 %s26, 2
      %s33 = sadd.s32 %s26, 1
      %s34 = ssub.s32 %s26, %s33
      %p35 = scmp.eq.s32.totalorder %s34, 0
      %s37 = sadd.s32 %s36, 1
      %s38 = scalar_select %p35, %s36, %s37
      %p41 = pneg %p35
      %p42 = scmp.eq.s32.totalorder %s26, 2
      %p43 = por %p41, %p42
      %p44 = scmp.ne.s32.totalorder %s36, %s39
      %p45 = scmp.eq.s32.totalorder %s26, 0
      %p46 = por %p44, %p45
      %p47 = scmp.ne.s32.totalorder %s36, %s39
      %p48 = scmp.eq.s32.totalorder %s31, 2
      %p49 = por %p47, %p48
      %p50 = scmp.ne.s32.totalorder %s39, %s40
      %p51 = scmp.eq.s32.totalorder %s31, 0
      %p52 = por %p50, %p51
      %p53 = scmp.ne.s32.totalorder %s39, %s40
      %p54 = scmp.eq.s32.totalorder %s32, 2
      %p55 = por %p53, %p54
      %p57 = scmp.ne.s32.totalorder %s40, %s56
      %p58 = scmp.eq.s32.totalorder %s32, 0
      %p59 = por %p57, %p58
      %s60 = ssub.s32 %s26, %s33
      %p61 = scmp.eq.s32.totalorder %s60, 0
      %s63 = sadd.s32 %s62, 1
      %s64 = scalar_select %p61, %s62, %s63
      %p67 = pneg %p61
      %p68 = scmp.eq.s32.totalorder %s26, 2
      %p69 = por %p67, %p68
      %p70 = scmp.ne.s32.totalorder %s62, %s65
      %p71 = scmp.eq.s32.totalorder %s26, 0
      %p72 = por %p70, %p71
      %p73 = scmp.ne.s32.totalorder %s62, %s65
      %p74 = scmp.eq.s32.totalorder %s31, 2
      %p75 = por %p73, %p74
      %p76 = scmp.ne.s32.totalorder %s65, %s66
      %p77 = scmp.eq.s32.totalorder %s31, 0
      %p78 = por %p76, %p77
      %p79 = scmp.ne.s32.totalorder %s65, %s66
      %p80 = scmp.eq.s32.totalorder %s32, 2
      %p81 = por %p79, %p80
      %p83 = scmp.ne.s32.totalorder %s66, %s82
      %p84 = scmp.eq.s32.totalorder %s32, 0
      %p85 = por %p83, %p84
      %s87 = sadd.s32 %s86, 1
      %p90 = scmp.eq.s32.totalorder %s26, 2
      %p91 = scmp.ne.s32.totalorder %s86, %s88
      %p92 = scmp.eq.s32.totalorder %s26, 0
      %p93 = por %p91, %p92
      %p94 = scmp.ne.s32.totalorder %s86, %s88
      %p95 = scmp.eq.s32.totalorder %s31, 2
      %p96 = por %p94, %p95
      %p97 = scmp.ne.s32.totalorder %s88, %s89
      %p98 = scmp.eq.s32.totalorder %s31, 0
      %p99 = por %p97, %p98
      %p100 = scmp.ne.s32.totalorder %s88, %s89
      %p101 = scmp.eq.s32.totalorder %s32, 2
      %p102 = por %p100, %p101
      %p104 = scmp.ne.s32.totalorder %s89, %s103
      %p105 = scmp.eq.s32.totalorder %s32, 0
      %p106 = por %p104, %p105
      %s108 = sadd.s32 %s107, 1
      %p111 = scmp.eq.s32.totalorder %s26, 2
      %p112 = scmp.ne.s32.totalorder %s107, %s109
      %p113 = scmp.eq.s32.totalorder %s26, 0
      %p114 = por %p112, %p113
      %p115 = scmp.ne.s32.totalorder %s107, %s109
      %p116 = scmp.eq.s32.totalorder %s31, 2
      %p117 = por %p115, %p116
      %p118 = scmp.ne.s32.totalorder %s109, %s110
      %p119 = scmp.eq.s32.totalorder %s31, 0
      %p120 = por %p118, %p119
      %p121 = scmp.ne.s32.totalorder %s109, %s110
      %p122 = scmp.eq.s32.totalorder %s32, 2
      %p123 = por %p121, %p122
      %p125 = scmp.ne.s32.totalorder %s110, %s124
      %p126 = scmp.eq.s32.totalorder %s32, 0
      %p127 = por %p125, %p126
      %s129 = sadd.s32 %s128, 1
      %p132 = scmp.eq.s32.totalorder %s26, 2
      %p133 = scmp.ne.s32.totalorder %s128, %s130
      %p134 = scmp.eq.s32.totalorder %s26, 0
      %p135 = por %p133, %p134
      %p136 = scmp.ne.s32.totalorder %s128, %s130
      %p137 = scmp.eq.s32.totalorder %s31, 2
      %p138 = por %p136, %p137
      %p139 = scmp.ne.s32.totalorder %s130, %s131
      %p140 = scmp.eq.s32.totalorder %s31, 0
      %p141 = por %p139, %p140
      %p142 = scmp.ne.s32.totalorder %s130, %s131
      %p143 = scmp.eq.s32.totalorder %s32, 2
      %p144 = por %p142, %p143
      %p146 = scmp.ne.s32.totalorder %s131, %s145
      %p147 = scmp.eq.s32.totalorder %s32, 0
      %p148 = por %p146, %p147
      %s150 = sadd.s32 %s149, 1
      %p153 = scmp.eq.s32.totalorder %s26, 2
      %p154 = scmp.ne.s32.totalorder %s149, %s151
      %p155 = scmp.eq.s32.totalorder %s26, 0
      %p156 = por %p154, %p155
      %p157 = scmp.ne.s32.totalorder %s149, %s151
      %p158 = scmp.eq.s32.totalorder %s31, 2
      %p159 = por %p157, %p158
      %p160 = scmp.ne.s32.totalorder %s151, %s152
      %p161 = scmp.eq.s32.totalorder %s31, 0
      %p162 = por %p160, %p161
      %p163 = scmp.ne.s32.totalorder %s151, %s152
      %p164 = scmp.eq.s32.totalorder %s32, 2
      %p165 = por %p163, %p164
      %p167 = scmp.ne.s32.totalorder %s152, %s166
      %p168 = scmp.eq.s32.totalorder %s32, 0
      %p169 = por %p167, %p168
      %s171 = sadd.s32 %s170, 1
      %p174 = scmp.eq.s32.totalorder %s26, 2
      %p175 = scmp.ne.s32.totalorder %s170, %s172
      %p176 = scmp.eq.s32.totalorder %s26, 0
      %p177 = por %p175, %p176
      %p178 = scmp.ne.s32.totalorder %s170, %s172
      %p179 = scmp.eq.s32.totalorder %s31, 2
      %p180 = por %p178, %p179
      %p181 = scmp.ne.s32.totalorder %s172, %s173
      %p182 = scmp.eq.s32.totalorder %s31, 0
      %p183 = por %p181, %p182
      %p184 = scmp.ne.s32.totalorder %s172, %s173
      %p185 = scmp.eq.s32.totalorder %s32, 2
      %p186 = por %p184, %p185
      %p188 = scmp.ne.s32.totalorder %s173, %s187
      %p189 = scmp.eq.s32.totalorder %s32, 0
      %p190 = por %p188, %p189
      %s191 = ssub.s32 %s26, %s33
      %p192 = scmp.eq.s32.totalorder %s191, 0
      %s194 = sadd.s32 %s193, 1
      %s195 = scalar_select %p192, %s193, %s194
      %p198 = pneg %p192
      %p199 = scmp.eq.s32.totalorder %s26, 2
      %p200 = por %p198, %p199
      %p201 = scmp.ne.s32.totalorder %s193, %s196
      %p202 = scmp.eq.s32.totalorder %s26, 0
      %p203 = por %p201, %p202
      %p204 = scmp.ne.s32.totalorder %s193, %s196
      %p205 = scmp.eq.s32.totalorder %s31, 2
      %p206 = por %p204, %p205
      %p207 = scmp.ne.s32.totalorder %s196, %s197
      %p208 = scmp.eq.s32.totalorder %s31, 0
      %p209 = por %p207, %p208
      %p210 = scmp.ne.s32.totalorder %s196, %s197
      %p211 = scmp.eq.s32.totalorder %s32, 2
      %p212 = por %p210, %p211
      %p214 = scmp.ne.s32.totalorder %s197, %s213
      %p215 = scmp.eq.s32.totalorder %s32, 0
      %p216 = por %p214, %p215
      %p217 = scmp.le.s32.totalorder 1, %s26
      %p218 = scmp.lt.s32.totalorder %s26, 4
      %p219 = pnand %p217, %p218
      %p220 = pneg %p219
      // Predicated region
      $region9: #{tpu_custom_call.1} parent=5 // pred_check
        _
      $region10: #{tpu_custom_call.1} parent=5 // pred_check_branch
        %222 = sbr.rel (%p219) target = $region12
      $region11: #{tpu_custom_call.1} parent=5 // pred_region
        %s223 = ssub.s32 %s26, 1
        // Predicated region
        $region13: #{tpu_custom_call.1} parent=11 // pred_check
          %p224 = pneg %p99
        $region14: #{tpu_custom_call.1} parent=11 // pred_check_branch
          %226 = sbr.rel (%p224) target = $region16
        $region15: #{tpu_custom_call.1} parent=11 // pred_region
          %s228 = ssub.s32 1024, 1024
          %229 = vsyncadd [#allocation7], %s228
          %s230 = sshll.u32 [#allocation8], 4
          %s231 = int_to_ptr.vmem [resolvable:$true] %s230
          %236 = dma.hbm_to_vmem [thread:$0]  %s2, 1024, %s231, [#allocation7], 128, 128, 8
        $region16: #{tpu_custom_call.1} parent=11 // pred_fallthru
          _
        // Predicated region
        $region17: #{tpu_custom_call.1} parent=11 // pred_check
          %p237 = pneg %p120
        $region18: #{tpu_custom_call.1} parent=11 // pred_check_branch
          %239 = sbr.rel (%p237) target = $region20
        $region19: #{tpu_custom_call.1} parent=11 // pred_region
          %s241 = ssub.s32 1024, 1024
          %242 = vsyncadd [#allocation10], %s241
          %s243 = sshll.u32 [#allocation9], 4
          %s244 = int_to_ptr.vmem [resolvable:$true] %s243
          %249 = dma.hbm_to_vmem [thread:$0]  %s3, 1024, %s244, [#allocation10], 128, 128, 8
        $region20: #{tpu_custom_call.1} parent=11 // pred_fallthru
          _
        // Predicated region
        $region21: #{tpu_custom_call.1} parent=11 // pred_check
          %p250 = pneg %p141
        $region22: #{tpu_custom_call.1} parent=11 // pred_check_branch
          %252 = sbr.rel (%p250) target = $region24
        $region23: #{tpu_custom_call.1} parent=11 // pred_region
          %s254 = ssub.s32 512, 512
          %255 = vsyncadd [#allocation10], %s254
          %s256 = sshll.u32 [#allocation11], 4
          %s257 = int_to_ptr.vmem [resolvable:$true] %s256
          %262 = dma.hbm_to_vmem [thread:$0]  %s4, 512, %s257, [#allocation10], 128, 128, 8
        $region24: #{tpu_custom_call.1} parent=11 // pred_fallthru
          _
        // Predicated region
        $region25: #{tpu_custom_call.1} parent=11 // pred_check
          %p263 = pneg %p162
        $region26: #{tpu_custom_call.1} parent=11 // pred_check_branch
          %265 = sbr.rel (%p263) target = $region28
        $region27: #{tpu_custom_call.1} parent=11 // pred_region
          %s267 = ssub.s32 512, 512
          %268 = vsyncadd [#allocation13], %s267
          %s269 = sshll.u32 [#allocation12], 4
          %s270 = int_to_ptr.vmem [resolvable:$true] %s269
          %275 = dma.hbm_to_vmem [thread:$0]  %s5, 512, %s270, [#allocation13], 128, 128, 8
        $region28: #{tpu_custom_call.1} parent=11 // pred_fallthru
          _
      $region12: #{tpu_custom_call.1} parent=5 // pred_fallthru
        _
      %p276 = scmp.lt.s32.totalorder %s26, 3
      // Predicated region
      $region29: #{tpu_custom_call.1} parent=5 // pred_check
        %p277 = pneg %p276
      $region30: #{tpu_custom_call.1} parent=5 // pred_check_branch
        %279 = sbr.rel (%p277) target = $region32
      $region31: #{tpu_custom_call.1} parent=5 // pred_region
        // Predicated region
        $region33: #{tpu_custom_call.1} parent=31 // pred_check
          %p280 = pneg %p46
        $region34: #{tpu_custom_call.1} parent=31 // pred_check_branch
          %282 = sbr.rel (%p280) target = $region36
        $region35: #{tpu_custom_call.1} parent=31 // pred_region
          %s283 = sand.u32 %s36, 1
          %s284 = scalar_lea.sflag [#allocation4], %s283
          %s285 = sand.u32 %s36, 1
          %s286 = smul.addr %s285, 2
          %s287 = scalar_lea.vmem [#allocation3], %s286
          %s289 = ssub.s32 32, 32
          %290 = vsyncadd %s284, %s289
          %s291 = smul.addr %s26, 32
          %s292 = scalar_lea.hbm %s0, %s291
          %s294 = sshll.u32 %s287, 4
          %s295 = int_to_ptr.vmem [resolvable:$true] %s294
          %297 = dma.hbm_to_vmem [thread:$0]  %s292, 32, %s295, %s284
        $region36: #{tpu_custom_call.1} parent=31 // pred_fallthru
          _
        // Predicated region
        $region37: #{tpu_custom_call.1} parent=31 // pred_check
          %p298 = pneg %p72
        $region38: #{tpu_custom_call.1} parent=31 // pred_check_branch
          %300 = sbr.rel (%p298) target = $region40
        $region39: #{tpu_custom_call.1} parent=31 // pred_region
          %s301 = sand.u32 %s26, 1
          %s302 = scalar_lea.sflag [#allocation7], %s301
          %s303 = sand.u32 %s62, 1
          %s304 = smul.addr %s303, 32
          %s305 = scalar_lea.vmem [#allocation6], %s304
          %s307 = ssub.s32 512, 512
          %308 = vsyncadd %s302, %s307
          %s309 = smul.addr %s26, 128
          %s310 = scalar_lea.hbm %s1, %s309
          %s311 = sshll.u32 %s305, 4
          %s312 = int_to_ptr.vmem [resolvable:$true] %s311
          %317 = dma.hbm_to_vmem [thread:$0]  %s310, 512, %s312, %s302, 384, 128, 8
        $region40: #{tpu_custom_call.1} parent=31 // pred_fallthru
          _
      $region32: #{tpu_custom_call.1} parent=5 // pred_fallthru
        _
      %p318 = scmp.le.s32.totalorder 1, %s26
      %p319 = scmp.lt.s32.totalorder %s26, 4
      %p320 = pnand %p318, %p319
      %p321 = pneg %p320
      // Predicated region
      $region41: #{tpu_custom_call.1} parent=5 // pred_check
        _
      $region42: #{tpu_custom_call.1} parent=5 // pred_check_branch
        %323 = sbr.rel (%p320) target = $region44
      $region43: #{tpu_custom_call.1} parent=5 // pred_region
        %s324 = ssub.s32 %s26, 1
        %s325 = sand.u32 %s39, 1
        %s326 = scalar_lea.sflag [#allocation4], %s325
        %s327 = sand.u32 %s39, 1
        %s328 = smul.addr %s327, 2
        %s329 = scalar_lea.vmem [#allocation3], %s328
        // Predicated region
        $region45: #{tpu_custom_call.1} parent=43 // pred_check
          %p330 = pneg %p52
        $region46: #{tpu_custom_call.1} parent=43 // pred_check_branch
          %332 = sbr.rel (%p330) target = $region48
        $region47: #{tpu_custom_call.1} parent=43 // pred_region
          %333 = dma.done %s326, 32
        $region48: #{tpu_custom_call.1} parent=43 // pred_fallthru
          _
        %s334 = sand.u32 %s31, 1
        %s335 = scalar_lea.sflag [#allocation7], %s334
        %s336 = sand.u32 %s65, 1
        %s337 = smul.addr %s336, 32
        %s338 = scalar_lea.vmem [#allocation6], %s337
        // Predicated region
        $region49: #{tpu_custom_call.1} parent=43 // pred_check
          %p339 = pneg %p78
        $region50: #{tpu_custom_call.1} parent=43 // pred_check_branch
          %341 = sbr.rel (%p339) target = $region52
        $region51: #{tpu_custom_call.1} parent=43 // pred_region
          %342 = dma.done %s335, 512
        $region52: #{tpu_custom_call.1} parent=43 // pred_fallthru
          _
        // Predicated region
        $region53: #{tpu_custom_call.1} parent=43 // pred_check
          %p343 = pneg %p99
        $region54: #{tpu_custom_call.1} parent=43 // pred_check_branch
          %345 = sbr.rel (%p343) target = $region56
        $region55: #{tpu_custom_call.1} parent=43 // pred_region
          %346 = dma.done [#allocation7], 1024
        $region56: #{tpu_custom_call.1} parent=43 // pred_fallthru
          _
        // Predicated region
        $region57: #{tpu_custom_call.1} parent=43 // pred_check
          %p347 = pneg %p120
        $region58: #{tpu_custom_call.1} parent=43 // pred_check_branch
          %349 = sbr.rel (%p347) target = $region60
        $region59: #{tpu_custom_call.1} parent=43 // pred_region
          %350 = dma.done [#allocation10], 1024
        $region60: #{tpu_custom_call.1} parent=43 // pred_fallthru
          _
        // Predicated region
        $region61: #{tpu_custom_call.1} parent=43 // pred_check
          %p351 = pneg %p141
        $region62: #{tpu_custom_call.1} parent=43 // pred_check_branch
          %353 = sbr.rel (%p351) target = $region64
        $region63: #{tpu_custom_call.1} parent=43 // pred_region
          %354 = dma.done [#allocation10], 512
        $region64: #{tpu_custom_call.1} parent=43 // pred_fallthru
          _
        // Predicated region
        $region65: #{tpu_custom_call.1} parent=43 // pred_check
          %p355 = pneg %p162
        $region66: #{tpu_custom_call.1} parent=43 // pred_check_branch
          %357 = sbr.rel (%p355) target = $region68
        $region67: #{tpu_custom_call.1} parent=43 // pred_region
          %358 = dma.done [#allocation13], 512
        $region68: #{tpu_custom_call.1} parent=43 // pred_fallthru
          _
        %s359 = sand.u32 %s39, 1
        %s360 = scalar_lea.sflag [#allocation4], %s359
        %s361 = sand.u32 %s39, 1
        %s362 = smul.addr %s361, 2
        %s363 = scalar_lea.vmem [#allocation3], %s362
        %p364 = pneg %p52
        %p365 = pneg %p49
        %s366 = sand.u32 %s31, 1
        %s367 = scalar_lea.sflag [#allocation7], %s366
        %s368 = sand.u32 %s65, 1
        %s369 = smul.addr %s368, 32
        %s370 = scalar_lea.vmem [#allocation6], %s369
        %p371 = pneg %p78
        %p372 = pneg %p75
        %p373 = pneg %p99
        %p374 = pneg %p96
        %p375 = pneg %p120
        %p376 = pneg %p117
        %p377 = pneg %p141
        %p378 = pneg %p138
        %p379 = pneg %p162
        %p380 = pneg %p159
        %p381 = pneg %p183
        %p382 = pneg %p180
        %p383 = pneg %p209
        %p384 = pneg %p206
        %s385 = sand.u32 %s196, 1
        %s386 = scalar_lea.sflag [#allocation16], %s385
        %s387 = sand.u32 %s196, 1
        %s388 = smul.addr %s387, 32
        %s389 = scalar_lea.vmem [#allocation15], %s388
        %p390 = scmp.eq.s32.totalorder %s31, 0
        // Predicated region
        $region69: #{tpu_custom_call.1} parent=43 // pred_check
          %p391 = pneg %p390
        $region70: #{tpu_custom_call.1} parent=43 // pred_check_branch
          %393 = sbr.rel (%p391) target = $region72
        $region71: #{tpu_custom_call.1} parent=43 // pred_region
          %vm394 = vcmask 130048
          %395 = vst.msk [vmem:[#allocation2] sm:$0xff] %vm394, 0.0
          %396 = vst.msk [vmem:[#allocation2 + $0x8] sm:$0xff] %vm394, 0.0
          %397 = vst.msk [vmem:[#allocation2 + $0x10] sm:$0xff] %vm394, 0.0
          %398 = vst.msk [vmem:[#allocation2 + $0x18] sm:$0xff] %vm394, 0.0
        $region72: #{tpu_custom_call.1} parent=43 // pred_fallthru
          _
        %v399 = vld [vmem:[%s329] sm:$0x1]
        %v400 = vld [vmem:[%s329 + $0x1] sm:$0x1]
        %v401 = vlaneseq
        %v402 = vshrl.u32 %v401, 7
        %v403 = vadd.s32 %v402, 8
        %v404 = vlaneseq
        %v405 = vshrl.u32 %v404, 7
        %v406 = vsub.s32 0, %v405
        %v407 = vrot.slane %v399, %v406
        %vm408 = vcmp.eq.s32.totalorder %v402, %v407
        %vm409 = vcmp.eq.s32.totalorder %v403, %v407
        %v410 = vsel %vm408, 1, 0
        %v411 = vsel %vm409, 1, 0
        %v412 = vcvt.s32.f32 %v410
        %v413 = vcvt.s32.f32 %v411
        %v414 = vlaneseq
        %v415 = vshrl.u32 %v414, 7
        %v416 = vsub.s32 0, %v415
        %v417 = vrot.slane %v400, %v416
        %vm418 = vcmp.eq.s32.totalorder %v402, %v417
        %vm419 = vcmp.eq.s32.totalorder %v403, %v417
        %v420 = vsel %vm418, 1, 0
        %v421 = vsel %vm419, 1, 0
        %v422 = vcvt.s32.f32 %v420
        %v423 = vcvt.s32.f32 %v421
        %v424 = vld [vmem:[%s338] sm:$0xff]
        %v425 = vld [vmem:[%s338 + $0x8] sm:$0xff]
        %v426 = vld [vmem:[%s338 + $0x10] sm:$0xff]
        %v427 = vld [vmem:[%s338 + $0x18] sm:$0xff]
        %v428 = vld [vmem:[#allocation8] sm:$0xff]
        %v429 = vld [vmem:[#allocation8 + $0x8] sm:$0xff]
        %v430 = vld [vmem:[#allocation8 + $0x10] sm:$0xff]
        %v431 = vld [vmem:[#allocation8 + $0x18] sm:$0xff]
        %v432 = vld [vmem:[#allocation8 + $0x20] sm:$0xff]
        %v433 = vld [vmem:[#allocation8 + $0x28] sm:$0xff]
        %v434 = vld [vmem:[#allocation8 + $0x30] sm:$0xff]
        %v435 = vld [vmem:[#allocation8 + $0x38] sm:$0xff]
        %v436 = vld [vmem:[#allocation9] sm:$0xff]
        %v437 = vld [vmem:[#allocation9 + $0x8] sm:$0xff]
        %v438 = vld [vmem:[#allocation9 + $0x10] sm:$0xff]
        %v439 = vld [vmem:[#allocation9 + $0x18] sm:$0xff]
        %v440 = vld [vmem:[#allocation9 + $0x20] sm:$0xff]
        %v441 = vld [vmem:[#allocation9 + $0x28] sm:$0xff]
        %v442 = vld [vmem:[#allocation9 + $0x30] sm:$0xff]
        %v443 = vld [vmem:[#allocation9 + $0x38] sm:$0xff]
        %445 = vset.pattern.permute.xlu0 0
        %446 = vperm.xlu0 %445, %v436
        %v447 = vpop.permute.xlu0 %446
        %450 = vset.pattern.permute.xlu0 0
        %451 = vperm.xlu0 %450, %v437
        %v452 = vpop.permute.xlu0 %451
        %455 = vset.pattern.permute.xlu0 0
        %456 = vperm.xlu0 %455, %v438
        %v457 = vpop.permute.xlu0 %456
        %460 = vset.pattern.permute.xlu0 0
        %461 = vperm.xlu0 %460, %v439
        %v462 = vpop.permute.xlu0 %461
        %465 = vset.pattern.permute.xlu0 0
        %466 = vperm.xlu0 %465, %v440
        %v467 = vpop.permute.xlu0 %466
        %470 = vset.pattern.permute.xlu0 0
        %471 = vperm.xlu0 %470, %v441
        %v472 = vpop.permute.xlu0 %471
        %475 = vset.pattern.permute.xlu0 0
        %476 = vperm.xlu0 %475, %v442
        %v477 = vpop.permute.xlu0 %476
        %480 = vset.pattern.permute.xlu0 0
        %481 = vperm.xlu0 %480, %v443
        %v482 = vpop.permute.xlu0 %481
        %vm484 = vcmask 523264
        %v486 = vsel %vm484, %v428, 0
        %v489 = vsel %vm484, %v429, 0
        %v492 = vsel %vm484, %v430, 0
        %v495 = vsel %vm484, %v431, 0
        %v498 = vsel %vm484, %v432, 0
        %v501 = vsel %vm484, %v433, 0
        %v504 = vsel %vm484, %v434, 0
        %v507 = vsel %vm484, %v435, 0
        %509 = vmatprep.subr.mxu0 0.0
        %510 = vmatpush1.msra.mxu0 %v412
        %511 = vmatprep.subr.mxu0 0.0
        %512 = vmatpush1.msra.mxu0 %v413
        %513 = vmatprep.subr.mxu0 0.0
        %514 = vmatpush1.msra.mxu0 %v422
        %515 = vmatprep.subr.mxu0 0.0
        %516 = vmatpush1.msra.mxu0 %v423
        %517 = vmatprep.subr.mxu0 0.0
        %518 = vmatpush1.msra.mxu0 %v424
        %519 = vmatprep.subr.mxu0 0.0
        %520 = vmatpush1.msra.mxu0 %v425
        %521 = vmatprep.subr.mxu0 0.0
        %522 = vmatpush1.msra.mxu0 %v426
        %523 = vmatprep.subr.mxu0 0.0
        %524 = vmatpush1.msra.mxu0 %v427
        %525 = vmatprep.subr.mxu0 0.0
        %526 = vmatpush1.msra.mxu0 0.0
        %527 = vmatprep.subr.mxu0 0.0
        %528 = vmatpush1.msra.mxu0 0.0
        %529 = vmatprep.subr.mxu0 0.0
        %530 = vmatpush1.msra.mxu0 0.0
        %531 = vmatprep.subr.mxu0 0.0
        %532 = vmatpush1.msra.mxu0 0.0
        %533 = vmatprep.subr.mxu0 0.0
        %534 = vmatpush1.msra.mxu0 0.0
        %535 = vmatprep.subr.mxu0 0.0
        %536 = vmatpush1.msra.mxu0 0.0
        %537 = vmatprep.subr.mxu0 0.0
        %538 = vmatpush1.msra.mxu0 0.0
        %539 = vmatprep.subr.mxu0 0.0
        %540 = vmatpush1.msra.mxu0 0.0
        %541 = vmatprep.subr.mxu0 0.0
        %542 = vmatpush1.msra.mxu0 0.0
        %543 = vmatprep.subr.mxu0 0.0
        %544 = vmatpush1.msra.mxu0 0.0
        %545 = vmatprep.subr.mxu0 0.0
        %546 = vmatpush1.msra.mxu0 0.0
        %547 = vmatprep.subr.mxu0 0.0
        %548 = vmatpush1.msra.mxu0 0.0
        %549 = vmatprep.subr.mxu0 0.0
        %550 = vmatpush1.msra.mxu0 0.0
        %551 = vmatprep.subr.mxu0 0.0
        %552 = vmatpush1.msra.mxu0 0.0
        %553 = vmatprep.subr.mxu0 0.0
        %554 = vmatpush1.msra.mxu0 0.0
        %555 = vmatprep.subr.mxu0 0.0
        %556 = vmatpush1.msra.mxu0 0.0
        %557 = vmatprep.subr.mxu0 0.0
        %558 = vmatpush1.msra.mxu0 0.0
        %559 = vmatprep.subr.mxu0 0.0
        %560 = vmatpush1.msra.mxu0 0.0
        %561 = vmatprep.subr.mxu0 0.0
        %562 = vmatpush1.msra.mxu0 0.0
        %563 = vmatprep.subr.mxu0 0.0
        %564 = vmatpush1.msra.mxu0 0.0
        %565 = vmatprep.subr.mxu0 0.0
        %566 = vmatpush1.msra.mxu0 0.0
        %567 = vmatprep.subr.mxu0 0.0
        %568 = vmatpush1.msra.mxu0 0.0
        %569 = vmatprep.subr.mxu0 0.0
        %570 = vmatpush1.msra.mxu0 0.0
        %571 = vmatprep.subr.mxu0 0.0
        %572 = vmatpush1.msra.mxu0 0.0
        %573 = vmatprep.mubr.f32.mxu0 0.0
        %574 = vmatmul.mubr.f32.gmra.mrb[0].mxu0 %v486
        %v575 = vpop.f32.mrb[0].mxu0
        %v576 = vadd.f32 %v447, %v575
        %v577 = vpop.f32.mrb[0].mxu0
        %578 = vmatprep.mubr.f32.mxu0 0.0
        %579 = vmatmul.mubr.f32.gmra.mrb[0].mxu0 %v489
        %v580 = vpop.f32.mrb[0].mxu0
        %v581 = vadd.f32 %v452, %v580
        %v582 = vpop.f32.mrb[0].mxu0
        %583 = vmatprep.mubr.f32.mxu0 0.0
        %584 = vmatmul.mubr.f32.gmra.mrb[0].mxu0 %v492
        %v585 = vpop.f32.mrb[0].mxu0
        %v586 = vadd.f32 %v457, %v585
        %v587 = vpop.f32.mrb[0].mxu0
        %588 = vmatprep.mubr.f32.mxu0 0.0
        %589 = vmatmul.mubr.f32.gmra.mrb[0].mxu0 %v495
        %v590 = vpop.f32.mrb[0].mxu0
        %v591 = vadd.f32 %v462, %v590
        %v592 = vpop.f32.mrb[0].mxu0
        %593 = vmatprep.mubr.f32.mxu0 0.0
        %594 = vmatmul.mubr.f32.gmra.mrb[0].mxu0 %v498
        %v595 = vpop.f32.mrb[0].mxu0
        %v596 = vadd.f32 %v467, %v595
        %v597 = vpop.f32.mrb[0].mxu0
        %598 = vmatprep.mubr.f32.mxu0 0.0
        %599 = vmatmul.mubr.f32.gmra.mrb[0].mxu0 %v501
        %v600 = vpop.f32.mrb[0].mxu0
        %v601 = vadd.f32 %v472, %v600
        %v602 = vpop.f32.mrb[0].mxu0
        %603 = vmatprep.mubr.f32.mxu0 0.0
        %604 = vmatmul.mubr.f32.gmra.mrb[0].mxu0 %v504
        %v605 = vpop.f32.mrb[0].mxu0
        %v606 = vadd.f32 %v477, %v605
        %v607 = vpop.f32.mrb[0].mxu0
        %608 = vmatprep.mubr.f32.mxu0 0.0
        %609 = vmatmul.mubr.f32.gmra.mrb[0].mxu0 %v507
        %v610 = vpop.f32.mrb[0].mxu0
        %v611 = vadd.f32 %v482, %v610
        %v612 = vpop.f32.mrb[0].mxu0
        %613 = vdwg.mxu0
        %614 = vst [vmem:[%s389] sm:$0xff] %v596
        %615 = vst [vmem:[%s389 + $0x8] sm:$0xff] %v601
        %616 = vst [vmem:[%s389 + $0x10] sm:$0xff] %v606
        %617 = vst [vmem:[%s389 + $0x18] sm:$0xff] %v611
        %v618 = vld [vmem:[#allocation2] sm:$0xff]
        %v619 = vld [vmem:[#allocation2 + $0x8] sm:$0xff]
        %v620 = vld [vmem:[#allocation2 + $0x10] sm:$0xff]
        %v621 = vld [vmem:[#allocation2 + $0x18] sm:$0xff]
        %622 = vmatprep.subr.mxu0 0.0
        %623 = vmatpush1.xpose.msra.mxu0 %v422
        %624 = vmatprep.subr.mxu0 0.0
        %625 = vmatpush1.xpose.msra.mxu0 %v423
        %626 = vmatprep.subr.mxu0 0.0
        %627 = vmatpush1.xpose.msra.mxu0 0.0
        %628 = vmatprep.subr.mxu0 0.0
        %629 = vmatpush1.xpose.msra.mxu0 0.0
        %630 = vmatprep.subr.mxu0 0.0
        %631 = vmatpush1.xpose.msra.mxu0 0.0
        %632 = vmatprep.subr.mxu0 0.0
        %633 = vmatpush1.xpose.msra.mxu0 0.0
        %634 = vmatprep.subr.mxu0 0.0
        %635 = vmatpush1.xpose.msra.mxu0 0.0
        %636 = vmatprep.subr.mxu0 0.0
        %637 = vmatpush1.xpose.msra.mxu0 0.0
        %638 = vmatprep.subr.mxu0 0.0
        %639 = vmatpush1.xpose.msra.mxu0 0.0
        %640 = vmatprep.subr.mxu0 0.0
        %641 = vmatpush1.xpose.msra.mxu0 0.0
        %642 = vmatprep.subr.mxu0 0.0
        %643 = vmatpush1.xpose.msra.mxu0 0.0
        %644 = vmatprep.subr.mxu0 0.0
        %645 = vmatpush1.xpose.msra.mxu0 0.0
        %646 = vmatprep.subr.mxu0 0.0
        %647 = vmatpush1.xpose.msra.mxu0 0.0
        %648 = vmatprep.subr.mxu0 0.0
        %649 = vmatpush1.xpose.msra.mxu0 0.0
        %650 = vmatprep.subr.mxu0 0.0
        %651 = vmatpush1.xpose.msra.mxu0 0.0
        %652 = vmatprep.subr.mxu0 0.0
        %653 = vmatpush1.xpose.msra.mxu0 0.0
        %654 = vmatprep.subr.mxu0 0.0
        %655 = vmatpush1.xpose.msra.mxu0 0.0
        %656 = vmatprep.subr.mxu0 0.0
        %657 = vmatpush1.xpose.msra.mxu0 0.0
        %658 = vmatprep.subr.mxu0 0.0
        %659 = vmatpush1.xpose.msra.mxu0 0.0
        %660 = vmatprep.subr.mxu0 0.0
        %661 = vmatpush1.xpose.msra.mxu0 0.0
        %662 = vmatprep.subr.mxu0 0.0
        %663 = vmatpush1.xpose.msra.mxu0 0.0
        %664 = vmatprep.subr.mxu0 0.0
        %665 = vmatpush1.xpose.msra.mxu0 0.0
        %666 = vmatprep.subr.mxu0 0.0
        %667 = vmatpush1.xpose.msra.mxu0 0.0
        %668 = vmatprep.subr.mxu0 0.0
        %669 = vmatpush1.xpose.msra.mxu0 0.0
        %670 = vmatprep.subr.mxu0 0.0
        %671 = vmatpush1.xpose.msra.mxu0 0.0
        %672 = vmatprep.subr.mxu0 0.0
        %673 = vmatpush1.xpose.msra.mxu0 0.0
        %674 = vmatprep.subr.mxu0 0.0
        %675 = vmatpush1.xpose.msra.mxu0 0.0
        %676 = vmatprep.subr.mxu0 0.0
        %677 = vmatpush1.xpose.msra.mxu0 0.0
        %678 = vmatprep.subr.mxu0 0.0
        %679 = vmatpush1.xpose.msra.mxu0 0.0
        %680 = vmatprep.subr.mxu0 0.0
        %681 = vmatpush1.xpose.msra.mxu0 0.0
        %682 = vmatprep.subr.mxu0 0.0
        %683 = vmatpush1.xpose.msra.mxu0 0.0
        %684 = vmatprep.subr.mxu0 0.0
        %685 = vmatpush1.xpose.msra.mxu0 0.0
        %686 = vmatprep.mubr.f32.mxu0 0.0
        %687 = vmatmul.mubr.f32.gmra.mrb[0].mxu0 %v576
        %v688 = vpop.f32.mrb[0].mxu0
        %v689 = vadd.f32 0.0, %v688
        %v690 = vpop.f32.mrb[0].mxu0
        %691 = vmatprep.mubr.f32.mxu0 0.0
        %692 = vmatmul.mubr.f32.gmra.mrb[0].mxu0 %v581
        %v693 = vpop.f32.mrb[0].mxu0
        %v694 = vadd.f32 0.0, %v693
        %v695 = vpop.f32.mrb[0].mxu0
        %696 = vmatprep.mubr.f32.mxu0 0.0
        %697 = vmatmul.mubr.f32.gmra.mrb[0].mxu0 %v586
        %v698 = vpop.f32.mrb[0].mxu0
        %v699 = vadd.f32 0.0, %v698
        %v700 = vpop.f32.mrb[0].mxu0
        %701 = vmatprep.mubr.f32.mxu0 0.0
        %702 = vmatmul.mubr.f32.gmra.mrb[0].mxu0 %v591
        %v703 = vpop.f32.mrb[0].mxu0
        %v704 = vadd.f32 0.0, %v703
        %v705 = vpop.f32.mrb[0].mxu0
        %706 = vdwg.mxu0
        %v707 = vadd.f32 %v618, %v689
        %v708 = vadd.f32 %v619, %v694
        %v709 = vadd.f32 %v620, %v699
        %v710 = vadd.f32 %v621, %v704
        %vm711 = vcmask 130048
        %712 = vst.msk [vmem:[#allocation2] sm:$0xff] %vm711, %v707
        %713 = vst.msk [vmem:[#allocation2 + $0x8] sm:$0xff] %vm711, %v708
        %714 = vst.msk [vmem:[#allocation2 + $0x10] sm:$0xff] %vm711, %v709
        %715 = vst.msk [vmem:[#allocation2 + $0x18] sm:$0xff] %vm711, %v710
        %p716 = scmp.eq.s32.totalorder %s31, 2
        // Predicated region
        $region73: #{tpu_custom_call.1} parent=43 // pred_check
          %p717 = pneg %p716
        $region74: #{tpu_custom_call.1} parent=43 // pred_check_branch
          %719 = sbr.rel (%p717) target = $region76
        $region75: #{tpu_custom_call.1} parent=43 // pred_region
          %v720 = vld [vmem:[#allocation12] sm:$0xff]
          %v721 = vld [vmem:[#allocation12 + $0x8] sm:$0xff]
          %v722 = vld [vmem:[#allocation12 + $0x10] sm:$0xff]
          %v723 = vld [vmem:[#allocation12 + $0x18] sm:$0xff]
          %v724 = vld [vmem:[#allocation11] sm:$0xff]
          %v725 = vld [vmem:[#allocation11 + $0x8] sm:$0xff]
          %v726 = vld [vmem:[#allocation11 + $0x10] sm:$0xff]
          %v727 = vld [vmem:[#allocation11 + $0x18] sm:$0xff]
          %v728 = vld [vmem:[#allocation2] sm:$0xff]
          %v729 = vld [vmem:[#allocation2 + $0x8] sm:$0xff]
          %v730 = vld [vmem:[#allocation2 + $0x10] sm:$0xff]
          %v731 = vld [vmem:[#allocation2 + $0x18] sm:$0xff]
          %vm732 = vcmask 261120
          %v734 = vsel %vm732, %v724, 0
          %v737 = vsel %vm732, %v725, 0
          %v740 = vsel %vm732, %v726, 0
          %v743 = vsel %vm732, %v727, 0
          %745 = vmatprep.subr.mxu0 0.0
          %746 = vmatpush1.msra.mxu0 %v728
          %747 = vmatprep.subr.mxu0 0.0
          %748 = vmatpush1.msra.mxu0 %v729
          %749 = vmatprep.subr.mxu0 0.0
          %750 = vmatpush1.msra.mxu0 %v730
          %751 = vmatprep.subr.mxu0 0.0
          %752 = vmatpush1.msra.mxu0 %v731
          %753 = vmatprep.subr.mxu0 0.0
          %754 = vmatpush1.msra.mxu0 0.0
          %755 = vmatprep.subr.mxu0 0.0
          %756 = vmatpush1.msra.mxu0 0.0
          %757 = vmatprep.subr.mxu0 0.0
          %758 = vmatpush1.msra.mxu0 0.0
          %759 = vmatprep.subr.mxu0 0.0
          %760 = vmatpush1.msra.mxu0 0.0
          %761 = vmatprep.subr.mxu0 0.0
          %762 = vmatpush1.msra.mxu0 0.0
          %763 = vmatprep.subr.mxu0 0.0
          %764 = vmatpush1.msra.mxu0 0.0
          %765 = vmatprep.subr.mxu0 0.0
          %766 = vmatpush1.msra.mxu0 0.0
          %767 = vmatprep.subr.mxu0 0.0
          %768 = vmatpush1.msra.mxu0 0.0
          %769 = vmatprep.subr.mxu0 0.0
          %770 = vmatpush1.msra.mxu0 0.0
          %771 = vmatprep.subr.mxu0 0.0
          %772 = vmatpush1.msra.mxu0 0.0
          %773 = vmatprep.subr.mxu0 0.0
          %774 = vmatpush1.msra.mxu0 0.0
          %775 = vmatprep.subr.mxu0 0.0
          %776 = vmatpush1.msra.mxu0 0.0
          %777 = vmatprep.subr.mxu0 0.0
          %778 = vmatpush1.msra.mxu0 0.0
          %779 = vmatprep.subr.mxu0 0.0
          %780 = vmatpush1.msra.mxu0 0.0
          %781 = vmatprep.subr.mxu0 0.0
          %782 = vmatpush1.msra.mxu0 0.0
          %783 = vmatprep.subr.mxu0 0.0
          %784 = vmatpush1.msra.mxu0 0.0
          %785 = vmatprep.subr.mxu0 0.0
          %786 = vmatpush1.msra.mxu0 0.0
          %787 = vmatprep.subr.mxu0 0.0
          %788 = vmatpush1.msra.mxu0 0.0
          %789 = vmatprep.subr.mxu0 0.0
          %790 = vmatpush1.msra.mxu0 0.0
          %791 = vmatprep.subr.mxu0 0.0
          %792 = vmatpush1.msra.mxu0 0.0
          %793 = vmatprep.subr.mxu0 0.0
          %794 = vmatpush1.msra.mxu0 0.0
          %795 = vmatprep.subr.mxu0 0.0
          %796 = vmatpush1.msra.mxu0 0.0
          %797 = vmatprep.subr.mxu0 0.0
          %798 = vmatpush1.msra.mxu0 0.0
          %799 = vmatprep.subr.mxu0 0.0
          %800 = vmatpush1.msra.mxu0 0.0
          %801 = vmatprep.subr.mxu0 0.0
          %802 = vmatpush1.msra.mxu0 0.0
          %803 = vmatprep.subr.mxu0 0.0
          %804 = vmatpush1.msra.mxu0 0.0
          %805 = vmatprep.subr.mxu0 0.0
          %806 = vmatpush1.msra.mxu0 0.0
          %807 = vmatprep.subr.mxu0 0.0
          %808 = vmatpush1.msra.mxu0 0.0
          %809 = vmatprep.mubr.f32.mxu0 0.0
          %810 = vmatmul.mubr.f32.gmra.mrb[0].mxu0 %v734
          %v811 = vpop.f32.mrb[0].mxu0
          %v812 = vadd.f32 0.0, %v811
          %v813 = vpop.f32.mrb[0].mxu0
          %814 = vmatprep.mubr.f32.mxu0 0.0
          %815 = vmatmul.mubr.f32.gmra.mrb[0].mxu0 %v737
          %v816 = vpop.f32.mrb[0].mxu0
          %v817 = vadd.f32 0.0, %v816
          %v818 = vpop.f32.mrb[0].mxu0
          %819 = vmatprep.mubr.f32.mxu0 0.0
          %820 = vmatmul.mubr.f32.gmra.mrb[0].mxu0 %v740
          %v821 = vpop.f32.mrb[0].mxu0
          %v822 = vadd.f32 0.0, %v821
          %v823 = vpop.f32.mrb[0].mxu0
          %824 = vmatprep.mubr.f32.mxu0 0.0
          %825 = vmatmul.mubr.f32.gmra.mrb[0].mxu0 %v743
          %v826 = vpop.f32.mrb[0].mxu0
          %v827 = vadd.f32 0.0, %v826
          %v828 = vpop.f32.mrb[0].mxu0
          %829 = vdwg.mxu0
          %v830 = vadd.f32 %v720, %v812
          %v831 = vadd.f32 %v721, %v817
          %v832 = vadd.f32 %v722, %v822
          %v833 = vadd.f32 %v723, %v827
          %834 = vst.msk [vmem:[#allocation14] sm:$0xff] %vm711, %v830
          %835 = vst.msk [vmem:[#allocation14 + $0x8] sm:$0xff] %vm711, %v831
          %836 = vst.msk [vmem:[#allocation14 + $0x10] sm:$0xff] %vm711, %v832
          %837 = vst.msk [vmem:[#allocation14 + $0x18] sm:$0xff] %vm711, %v833
        $region76: #{tpu_custom_call.1} parent=43 // pred_fallthru
          _
        %s838 = sand.u32 %s196, 1
        %s839 = scalar_lea.sflag [#allocation16], %s838
        %s840 = sand.u32 %s196, 1
        %s841 = smul.addr %s840, 32
        %s842 = scalar_lea.vmem [#allocation15], %s841
        // Predicated region
        $region77: #{tpu_custom_call.1} parent=43 // pred_check
          %p843 = pneg %p180
        $region78: #{tpu_custom_call.1} parent=43 // pred_check_branch
          %845 = sbr.rel (%p843) target = $region80
        $region79: #{tpu_custom_call.1} parent=43 // pred_region
          %s847 = ssub.s32 512, 512
          %848 = vsyncadd [#allocation5], %s847
          %s849 = sshll.u32 [#allocation14], 4
          %s850 = int_to_ptr.vmem [resolvable:$true] %s849
          %855 = dma.vmem_to_hbm [thread:$0]  %s850, 512, %s6, [#allocation5], 128, 128, 8
        $region80: #{tpu_custom_call.1} parent=43 // pred_fallthru
          _
        // Predicated region
        $region81: #{tpu_custom_call.1} parent=43 // pred_check
          %p856 = pneg %p206
        $region82: #{tpu_custom_call.1} parent=43 // pred_check_branch
          %858 = sbr.rel (%p856) target = $region84
        $region83: #{tpu_custom_call.1} parent=43 // pred_region
          %s860 = ssub.s32 512, 512
          %861 = vsyncadd %s839, %s860
          %s862 = smul.addr %s31, 128
          %s863 = scalar_lea.hbm %s7, %s862
          %s864 = sshll.u32 %s842, 4
          %s865 = int_to_ptr.vmem [resolvable:$true] %s864
          %870 = dma.vmem_to_hbm [thread:$0]  %s865, 512, %s863, %s839, 128, 384, 8
        $region84: #{tpu_custom_call.1} parent=43 // pred_fallthru
          _
        // Predicated region
        $region85: #{tpu_custom_call.1} parent=43 // pred_check
          %p871 = pneg %p180
        $region86: #{tpu_custom_call.1} parent=43 // pred_check_branch
          %873 = sbr.rel (%p871) target = $region88
        $region87: #{tpu_custom_call.1} parent=43 // pred_region
          %874 = dma.done [#allocation5], 512
        $region88: #{tpu_custom_call.1} parent=43 // pred_fallthru
          _
      $region44: #{tpu_custom_call.1} parent=5 // pred_fallthru
        _
      %p875 = scmp.le.s32.totalorder 2, %s26
      // Predicated region
      $region89: #{tpu_custom_call.1} parent=5 // pred_check
        %p876 = pneg %p875
      $region90: #{tpu_custom_call.1} parent=5 // pred_check_branch
        %878 = sbr.rel (%p876) target = $region92
      $region91: #{tpu_custom_call.1} parent=5 // pred_region
        %s879 = ssub.s32 %s26, 2
        // Predicated region
        $region93: #{tpu_custom_call.1} parent=91 // pred_check
          %p880 = pneg %p212
        $region94: #{tpu_custom_call.1} parent=91 // pred_check_branch
          %882 = sbr.rel (%p880) target = $region96
        $region95: #{tpu_custom_call.1} parent=91 // pred_region
          %s883 = sand.u32 %s197, 1
          %s884 = scalar_lea.sflag [#allocation16], %s883
          %s885 = sand.u32 %s197, 1
          %s886 = smul.addr %s885, 32
          %s887 = scalar_lea.vmem [#allocation15], %s886
          %888 = dma.done %s884, 512
        $region96: #{tpu_custom_call.1} parent=91 // pred_fallthru
          _
      $region92: #{tpu_custom_call.1} parent=5 // pred_fallthru
        _
    $region6: #{tpu_custom_call.1} parent=1 // loop_footer
      %s30 = sadd.s32 1, %s26
    $region7: #{tpu_custom_call.1} parent=1 // loop_footer_branch
      %25 = sbr.rel target = $region3
    $region8: #{tpu_custom_call.1} parent=1 // loop_exit
      _
    %889 = vsyncpa [#allocation4], 1
    %s890 = scalar_lea.sflag [#allocation4], 1
    %891 = vsyncpa %s890, 1
    %892 = vsyncpa [#allocation7], 1
    %s893 = scalar_lea.sflag [#allocation7], 1
    %894 = vsyncpa %s893, 1
    %895 = vsyncpa [#allocation10], 1
    %896 = vsyncpa [#allocation13], 1
    %897 = vsyncpa [#allocation5], 1
    %s898 = scalar_lea.sflag [#allocation5], 1
    %899 = vsyncpa %s898, 1
    %900 = vsyncpa [#allocation16], 1
    %s901 = scalar_lea.sflag [#allocation16], 1
    %902 = vsyncpa %s901, 1

</llo_original>
